<compile_context>
chip_gen: v6e
topology: v6e:2x2x1
jax: 0.10.0
libtpu: 0.0.40
codegen_flags: <defaults>
</compile_context>

<pallas_src>
import functools

import jax
import jax.numpy as jnp
from jax.experimental import pallas as pl
from jax.experimental.pallas import tpu as pltpu


def _relu6(x):
    # aten.relu6 == clamp(x, 0, 6)
    return jnp.clip(x, 0.0, 6.0)


def model_kernel(lhs_ref, wcat_ref, wtt_ref, b_ref, o_ref):
    # lhs_ref : (TM, D)  permuted + flattened x rows (row r = batch*N + n);
    #                    contraction happens on the last (lane) dim.
    # wcat_ref: (D, 2D)  concat([W.T, W], axis=1) -> one fused MXU pass for
    #                    both linear() calls (they share the LHS).
    # wtt_ref : (TM, D)  W.T tiled over the TB batches of one block
    #                    (row r uses W.T[r % N]); block index is constant so
    #                    this is DMA'd only once across the whole grid.
    # b_ref   : (1, D)   nn.Linear bias (broadcasts over rows).
    # o_ref   : (TM, D)
    D = wcat_ref.shape[0]

    xm = lhs_ref[...].astype(jnp.float32) - 0.5          # sub(v1, 0.5)
    wcat = wcat_ref[...].astype(jnp.float32)
    b = b_ref[...].astype(jnp.float32)

    # Single (TM, D) x (D, 2D) matmul feeds both linears; no LHS transpose.
    fused = jnp.dot(xm, wcat, preferred_element_type=jnp.float32)  # (TM, 2D)
    # Lane slices at D=16 stay inside one 128-lane vreg (cheap selects/rots).
    v2 = fused[:, :D] + b          # linear(a, W,   b) = a @ W.T + b
    v4 = fused[:, D:] + b          # linear(a, W.T, b) = a @ W   + b

    v3 = v2 * 0.25 - 0.25          # mul(v2, 0.25); sub(v3, 0.25)
    v4 = v3 - _relu6(v4)           # relu6(v4); sub(v3, v4)
    v5 = _relu6(v4 + 0.25)         # relu6(add(v4, 0.25))

    # TODO(synk): aten.expand(v5, (B, 16)) requests fewer dims than v5 has,
    # which is invalid in PyTorch; treated as a broadcast no-op here (shapes
    # are already broadcast-compatible), matching the pure-JAX reference.
    v5 = v5 * wtt_ref[...].astype(jnp.float32)   # mul(v6, W.T), row-aligned per batch
    v5 = _relu6(v5) + 0.25                       # relu6(v5); add(v5, 0.25)
    o_ref[...] = (v5 * v3).astype(o_ref.dtype)   # mul(v5, v3)


def _pick_batches_per_block(B, max_tb):
    # Largest divisor of B not exceeding max_tb; when B > 1 prefer >= 2 grid
    # steps so both v7x TensorCores get balanced work under "parallel".
    divisors = [tb for tb in range(1, min(B, max_tb) + 1) if B % tb == 0]
    tb = divisors[-1]
    if tb == B and B > 1:
        smaller = [d for d in divisors if d < B]
        if smaller:
            tb = smaller[-1]
    return tb


def model_forward(x, w, b, *, max_batches_per_block=256):
    # x: (B, D, N), w: (D, D) nn.Linear weight, b: (D,) bias
    B, D, N = x.shape
    assert N == D, (
        "the module's elementwise mul with W.T only broadcasts when the "
        "permuted sequence length equals the linear width (N == D)")

    # ---- wrapper-side layout plumbing (tiny / one-time XLA ops) -----------
    w_t = jnp.transpose(w)                       # (D, D)  = W.T
    w_cat = jnp.concatenate([w_t, w], axis=1)    # (D, 2D) = [W.T | W]
    b2 = b.reshape(1, D)

    # Fold the module's permute(0, 2, 1) into a wrapper transpose + row
    # flatten so the kernel contracts on the LHS last (lane) dim.
    lhs = jnp.transpose(x, (0, 2, 1)).reshape(B * N, D)   # (M, D)
    M = B * N

    tb = _pick_batches_per_block(B, max_batches_per_block)
    tm = tb * N                                  # rows per grid step (mult. of 8)
    grid = (M // tm,)

    # W.T tiled across the tb batches of one block: flat row r uses W.T[r % N].
    wtt = jnp.tile(w_t, (tb, 1))                 # (tm, D)

    # Per-step VMEM footprint (tm=4096 worst case): ~256 KiB per block, x2 for
    # double buffering -- comfortably inside v5e/v6e/v7x scoped VMEM.
    out = pl.pallas_call(
        model_kernel,
        out_shape=jax.ShapeDtypeStruct((M, D), x.dtype),
        grid=grid,
        in_specs=[
            pl.BlockSpec((tm, D), lambda i: (i, 0)),        # lhs rows
            pl.BlockSpec((D, 2 * D), lambda i: (0, 0)),     # [W.T | W], fetched once
            pl.BlockSpec((tm, D), lambda i: (0, 0)),        # tiled W.T, fetched once
            pl.BlockSpec((1, D), lambda i: (0, 0)),         # bias, fetched once
        ],
        out_specs=pl.BlockSpec((tm, D), lambda i: (i, 0)),
        compiler_params=pltpu.CompilerParams(
            dimension_semantics=("parallel",)),
    )(lhs, w_cat, wtt, b2)

    return out.reshape(B, N, D)


def model_reference(x, w, b):
    # Pure-JAX reference mirroring the PyTorch graph (f32 throughout).
    a = jnp.transpose(x, (0, 2, 1)) - 0.5
    v2 = jnp.einsum("bnd,kd->bnk", a, w) + b
    v3 = v2 * 0.25 - 0.25
    v4 = _relu6(jnp.einsum("bnd,dk->bnk", a, w) + b)
    v4 = v3 - v4
    v5 = _relu6(v4 + 0.25)
    v5 = v5 * jnp.transpose(w)[None, :, :]
    v5 = _relu6(v5) + 0.25
    return v5 * v3


if __name__ == "__main__":
    key = jax.random.PRNGKey(0)
    kx, kw, kb = jax.random.split(key, 3)

    # D = in_features = out_features = 16; N chosen equal to D so the
    # (N, D) * (D, D) broadcast in the forward is valid; small batch B = 8
    # exercises the batched grid (tb = 4 -> grid = (2,), both v7x cores busy).
    B, D, N = 8, 16, 16

    x = jax.random.normal(kx, (B, D, N), dtype=jnp.float32)
    # nn.Linear(16, 16)-shaped params, deterministic uniform init like PyTorch.
    bound = 1.0 / jnp.sqrt(jnp.float32(D))
    w = jax.random.uniform(kw, (D, D), jnp.float32, -bound, bound)
    b = jax.random.uniform(kb, (D,), jnp.float32, -bound, bound)

    fwd = jax.jit(functools.partial(model_forward))
    out = jax.block_until_ready(fwd(x, w, b))
    ref = model_reference(x, w, b)

    assert out.shape == (B, N, D)
    assert jnp.allclose(out, ref, atol=1e-5, rtol=1e-5), "mismatch vs JAX reference"
    print("KERNEL_OK")
</pallas_src>

<mosaic_0001>
module attributes {stable_mosaic.version = 11 : i64} {
  func.func @model_kernel(%arg0: i32, %arg1: memref<64x16xf32, #tpu.memory_space<vmem>>, %arg2: memref<16x32xf32, #tpu.memory_space<vmem>>, %arg3: memref<64x16xf32, #tpu.memory_space<vmem>>, %arg4: memref<1x16xf32, #tpu.memory_space<vmem>>, %arg5: memref<64x16xf32, #tpu.memory_space<vmem>>) attributes {dimension_semantics = [#tpu.dimension_semantics<parallel>], iteration_bounds = array<i64: 2>, scalar_prefetch = 0 : i64, scratch_operands = 0 : i64, tpu.core_type = #tpu.core_type<tc>, window_params = [{transform_indices = @transform_0, window_bounds = array<i64: 64, 16>}, {pipeline_mode = #tpu.pipeline_mode<synchronous>, transform_indices = @transform_1, window_bounds = array<i64: 16, 32>}, {pipeline_mode = #tpu.pipeline_mode<synchronous>, transform_indices = @transform_2, window_bounds = array<i64: 64, 16>}, {pipeline_mode = #tpu.pipeline_mode<synchronous>, transform_indices = @transform_3, window_bounds = array<i64: 1, 16>}, {transform_indices = @transform_4, window_bounds = array<i64: 64, 16>}]} {
    %c0 = arith.constant 0 : index
    %c0_0 = arith.constant 0 : index
    %0 = vector.load %arg1[%c0, %c0_0] : memref<64x16xf32, #tpu.memory_space<vmem>>, vector<64x16xf32>
    %cst = arith.constant 5.000000e-01 : f32
    %1 = vector.broadcast %cst : f32 to vector<64x16xf32>
    %2 = arith.subf %0, %1 : vector<64x16xf32>
    %c0_1 = arith.constant 0 : index
    %c0_2 = arith.constant 0 : index
    %3 = vector.load %arg2[%c0_1, %c0_2] : memref<16x32xf32, #tpu.memory_space<vmem>>, vector<16x32xf32>
    %c0_3 = arith.constant 0 : index
    %c0_4 = arith.constant 0 : index
    %4 = vector.load %arg4[%c0_3, %c0_4] : memref<1x16xf32, #tpu.memory_space<vmem>>, vector<1x16xf32>
    %cst_5 = arith.constant dense<0.000000e+00> : vector<64x32xf32>
    %5 = tpu.matmul %2, %3, %cst_5 {dimension_numbers = #tpu.dot_dimension_numbers<[1], [0], [0], [1], [0, 0, 1, 1], [], []>} : vector<64x16xf32>, vector<16x32xf32>, vector<64x32xf32> -> vector<64x32xf32>
    %6 = vector.extract_strided_slice %5 {offsets = [0, 0], sizes = [64, 16], strides = [1, 1]} : vector<64x32xf32> to vector<64x16xf32>
    %7 = vector.broadcast %4 : vector<1x16xf32> to vector<64x16xf32>
    %8 = arith.addf %6, %7 : vector<64x16xf32>
    %9 = vector.extract_strided_slice %5 {offsets = [0, 16], sizes = [64, 16], strides = [1, 1]} : vector<64x32xf32> to vector<64x16xf32>
    %10 = vector.broadcast %4 : vector<1x16xf32> to vector<64x16xf32>
    %11 = arith.addf %9, %10 : vector<64x16xf32>
    %cst_6 = arith.constant 2.500000e-01 : f32
    %12 = vector.broadcast %cst_6 : f32 to vector<64x16xf32>
    %13 = arith.mulf %8, %12 : vector<64x16xf32>
    %cst_7 = arith.constant 2.500000e-01 : f32
    %14 = vector.broadcast %cst_7 : f32 to vector<64x16xf32>
    %15 = arith.subf %13, %14 : vector<64x16xf32>
    %cst_8 = arith.constant 0.000000e+00 : f32
    %cst_9 = arith.constant 6.000000e+00 : f32
    %16 = vector.broadcast %cst_8 : f32 to vector<64x16xf32>
    %17 = arith.maximumf %16, %11 : vector<64x16xf32>
    %18 = vector.broadcast %cst_9 : f32 to vector<64x16xf32>
    %19 = arith.minimumf %18, %17 : vector<64x16xf32>
    %20 = arith.subf %15, %19 : vector<64x16xf32>
    %cst_10 = arith.constant 2.500000e-01 : f32
    %21 = vector.broadcast %cst_10 : f32 to vector<64x16xf32>
    %22 = arith.addf %20, %21 : vector<64x16xf32>
    %cst_11 = arith.constant 0.000000e+00 : f32
    %cst_12 = arith.constant 6.000000e+00 : f32
    %23 = vector.broadcast %cst_11 : f32 to vector<64x16xf32>
    %24 = arith.maximumf %23, %22 : vector<64x16xf32>
    %25 = vector.broadcast %cst_12 : f32 to vector<64x16xf32>
    %26 = arith.minimumf %25, %24 : vector<64x16xf32>
    %c0_13 = arith.constant 0 : index
    %c0_14 = arith.constant 0 : index
    %27 = vector.load %arg3[%c0_13, %c0_14] : memref<64x16xf32, #tpu.memory_space<vmem>>, vector<64x16xf32>
    %28 = arith.mulf %26, %27 : vector<64x16xf32>
    %cst_15 = arith.constant 0.000000e+00 : f32
    %cst_16 = arith.constant 6.000000e+00 : f32
    %29 = vector.broadcast %cst_15 : f32 to vector<64x16xf32>
    %30 = arith.maximumf %29, %28 : vector<64x16xf32>
    %31 = vector.broadcast %cst_16 : f32 to vector<64x16xf32>
    %32 = arith.minimumf %31, %30 : vector<64x16xf32>
    %cst_17 = arith.constant 2.500000e-01 : f32
    %33 = vector.broadcast %cst_17 : f32 to vector<64x16xf32>
    %34 = arith.addf %32, %33 : vector<64x16xf32>
    %35 = arith.mulf %34, %15 : vector<64x16xf32>
    %c0_18 = arith.constant 0 : index
    %c0_19 = arith.constant 0 : index
    %36 = vector.load %arg5[%c0_18, %c0_19] : memref<64x16xf32, #tpu.memory_space<vmem>>, vector<64x16xf32>
    tpu.vector_store %arg5[%c0_18, %c0_19], %35 {strides = array<i32>} : memref<64x16xf32, #tpu.memory_space<vmem>>, vector<64x16xf32>,
    return
  }
  func.func @transform_0(%arg0: i32) -> (i32, i32) {
    %c0_i32 = arith.constant 0 : i32
    %c0_i32_0 = arith.constant 0 : i32
    return %arg0, %c0_i32 : i32, i32
  }
  func.func @transform_1(%arg0: i32) -> (i32, i32) {
    %c0_i32 = arith.constant 0 : i32
    %c0_i32_0 = arith.constant 0 : i32
    %c0_i32_1 = arith.constant 0 : i32
    return %c0_i32, %c0_i32_0 : i32, i32
  }
  func.func @transform_2(%arg0: i32) -> (i32, i32) {
    %c0_i32 = arith.constant 0 : i32
    %c0_i32_0 = arith.constant 0 : i32
    %c0_i32_1 = arith.constant 0 : i32
    return %c0_i32, %c0_i32_0 : i32, i32
  }
  func.func @transform_3(%arg0: i32) -> (i32, i32) {
    %c0_i32 = arith.constant 0 : i32
    %c0_i32_0 = arith.constant 0 : i32
    %c0_i32_1 = arith.constant 0 : i32
    return %c0_i32, %c0_i32_0 : i32, i32
  }
  func.func @transform_4(%arg0: i32) -> (i32, i32) {
    %c0_i32 = arith.constant 0 : i32
    %c0_i32_0 = arith.constant 0 : i32
    return %arg0, %c0_i32 : i32, i32
  }
}

</mosaic_0001>

<llo_original>
// kernel: model_forward.1
$region0: #{model_forward.1}
  #allocation0 [shape = 'u32[]', space=smem, size = 0x4, offset = 0x4, fixed_abs, tag = 'smem constant byte address 0x4 - core index']
  #allocation1 [shape = 'u32[144,128]{1,0:T(1,128)}', space=vmem, size = 0x12000, scoped, tag = 'internal scratch']
  %s0 = inlined_call_operand.vmem [shape: f32[128,16], index: 0, kind: input, shape index: {}]
  %s1 = inlined_call_operand.vmem [shape: f32[16,32], index: 1, kind: input, shape index: {}]
  %s2 = inlined_call_operand.vmem [shape: f32[64,16], index: 2, kind: input, shape index: {}]
  %s3 = inlined_call_operand.vmem [shape: f32[1,16], index: 3, kind: input, shape index: {}]
  %s4 = inlined_call_operand.hbm [shape: f32[128,16], index: 4, kind: output, shape index: {}]
  %s5 = sld [smem:[#allocation0]]
  $region49: #{model_forward.1} parent=0
    _
  %s7 = ssub.s32 1, %s5
  %s8 = scalar_select 0, %s7, %s5
  $region1: #{model_forward.1} parent=0
    #allocation2 [shape = 'u8[65536]{0}', space=vmem, size = 0x10000, scoped, tag = 'output window, operand 0']
    #allocation3 [shape = 's32[2]{0}', space=sflag, size = 0x8, scoped, tag = 'scoped memory for model_forward.1']
    %9 = vsyncpa [#allocation3], 0
    %s10 = scalar_lea.sflag [#allocation3], 1
    %11 = vsyncpa %s10, 0
    loop: start=0, step=1, limit=4
    $region2: #{model_forward.1} parent=1 // loop_pre_header
      _
    $region3: #{model_forward.1} parent=1 // loop_header
      %s13 = sphi 0, %s17
      %p14 = scmp.ge.s32.totalorder %s13, 4
      %s23 = sphi 0, %s25
      %s26 = sphi 0, %s23
      %s27 = sphi 0, %s26
      %s43 = sphi 0, %s27
      %s47 = sphi 0, %s47
      %s49 = sphi 0, %s47
      %s50 = sphi 0, %s49
      %s64 = sphi 0, %s50
      %s68 = sphi 0, %s68
      %s70 = sphi 0, %s68
      %s71 = sphi 0, %s70
      %s85 = sphi 0, %s71
      %s89 = sphi 0, %s89
      %s91 = sphi 0, %s89
      %s92 = sphi 0, %s91
      %s106 = sphi 0, %s92
      %s112 = sphi 0, %s114
      %s115 = sphi 0, %s112
      %s116 = sphi 0, %s115
      %s132 = sphi 0, %s116
    $region4: #{model_forward.1} parent=1 // loop_header_branch
      %16 = sbr.rel (%p14) target = $region8
    $region5: #{model_forward.1} parent=1 // loop_body
      %s18 = ssub.s32 %s13, 1
      %s19 = ssub.s32 %s13, 2
      %s20 = sadd.s32 %s13, 1
      %s21 = ssub.s32 %s13, %s20
      %p22 = scmp.eq.s32.totalorder %s21, 0
      %s24 = sadd.s32 %s23, 1
      %s25 = scalar_select %p22, %s23, %s24
      %p28 = pneg %p22
      %p29 = scmp.eq.s32.totalorder %s13, 1
      %p30 = por %p28, %p29
      %p31 = scmp.ne.s32.totalorder %s23, %s26
      %p32 = scmp.eq.s32.totalorder %s13, 0
      %p33 = por %p31, %p32
      %p34 = scmp.ne.s32.totalorder %s23, %s26
      %p35 = scmp.eq.s32.totalorder %s18, 1
      %p36 = por %p34, %p35
      %p37 = scmp.ne.s32.totalorder %s26, %s27
      %p38 = scmp.eq.s32.totalorder %s18, 0
      %p39 = por %p37, %p38
      %p40 = scmp.ne.s32.totalorder %s26, %s27
      %p41 = scmp.eq.s32.totalorder %s19, 1
      %p42 = por %p40, %p41
      %p44 = scmp.ne.s32.totalorder %s27, %s43
      %p45 = scmp.eq.s32.totalorder %s19, 0
      %p46 = por %p44, %p45
      %s48 = sadd.s32 %s47, 1
      %p51 = scmp.eq.s32.totalorder %s13, 1
      %p52 = scmp.ne.s32.totalorder %s47, %s49
      %p53 = scmp.eq.s32.totalorder %s13, 0
      %p54 = por %p52, %p53
      %p55 = scmp.ne.s32.totalorder %s47, %s49
      %p56 = scmp.eq.s32.totalorder %s18, 1
      %p57 = por %p55, %p56
      %p58 = scmp.ne.s32.totalorder %s49, %s50
      %p59 = scmp.eq.s32.totalorder %s18, 0
      %p60 = por %p58, %p59
      %p61 = scmp.ne.s32.totalorder %s49, %s50
      %p62 = scmp.eq.s32.totalorder %s19, 1
      %p63 = por %p61, %p62
      %p65 = scmp.ne.s32.totalorder %s50, %s64
      %p66 = scmp.eq.s32.totalorder %s19, 0
      %p67 = por %p65, %p66
      %s69 = sadd.s32 %s68, 1
      %p72 = scmp.eq.s32.totalorder %s13, 1
      %p73 = scmp.ne.s32.totalorder %s68, %s70
      %p74 = scmp.eq.s32.totalorder %s13, 0
      %p75 = por %p73, %p74
      %p76 = scmp.ne.s32.totalorder %s68, %s70
      %p77 = scmp.eq.s32.totalorder %s18, 1
      %p78 = por %p76, %p77
      %p79 = scmp.ne.s32.totalorder %s70, %s71
      %p80 = scmp.eq.s32.totalorder %s18, 0
      %p81 = por %p79, %p80
      %p82 = scmp.ne.s32.totalorder %s70, %s71
      %p83 = scmp.eq.s32.totalorder %s19, 1
      %p84 = por %p82, %p83
      %p86 = scmp.ne.s32.totalorder %s71, %s85
      %p87 = scmp.eq.s32.totalorder %s19, 0
      %p88 = por %p86, %p87
      %s90 = sadd.s32 %s89, 1
      %p93 = scmp.eq.s32.totalorder %s13, 1
      %p94 = scmp.ne.s32.totalorder %s89, %s91
      %p95 = scmp.eq.s32.totalorder %s13, 0
      %p96 = por %p94, %p95
      %p97 = scmp.ne.s32.totalorder %s89, %s91
      %p98 = scmp.eq.s32.totalorder %s18, 1
      %p99 = por %p97, %p98
      %p100 = scmp.ne.s32.totalorder %s91, %s92
      %p101 = scmp.eq.s32.totalorder %s18, 0
      %p102 = por %p100, %p101
      %p103 = scmp.ne.s32.totalorder %s91, %s92
      %p104 = scmp.eq.s32.totalorder %s19, 1
      %p105 = por %p103, %p104
      %p107 = scmp.ne.s32.totalorder %s92, %s106
      %p108 = scmp.eq.s32.totalorder %s19, 0
      %p109 = por %p107, %p108
      %s110 = ssub.s32 %s13, %s20
      %p111 = scmp.eq.s32.totalorder %s110, 0
      %s113 = sadd.s32 %s112, 1
      %s114 = scalar_select %p111, %s112, %s113
      %p117 = pneg %p111
      %p118 = scmp.eq.s32.totalorder %s13, 1
      %p119 = por %p117, %p118
      %p120 = scmp.ne.s32.totalorder %s112, %s115
      %p121 = scmp.eq.s32.totalorder %s13, 0
      %p122 = por %p120, %p121
      %p123 = scmp.ne.s32.totalorder %s112, %s115
      %p124 = scmp.eq.s32.totalorder %s18, 1
      %p125 = por %p123, %p124
      %p126 = scmp.ne.s32.totalorder %s115, %s116
      %p127 = scmp.eq.s32.totalorder %s18, 0
      %p128 = por %p126, %p127
      %p129 = scmp.ne.s32.totalorder %s115, %s116
      %p130 = scmp.eq.s32.totalorder %s19, 1
      %p131 = por %p129, %p130
      %p133 = scmp.ne.s32.totalorder %s116, %s132
      %p134 = scmp.eq.s32.totalorder %s19, 0
      %p135 = por %p133, %p134
      %p136 = scmp.le.s32.totalorder 1, %s13
      %p137 = scmp.lt.s32.totalorder %s13, 3
      %p138 = pnand %p136, %p137
      %p139 = pneg %p138
      // Predicated region
      $region9: #{model_forward.1} parent=5 // pred_check
        _
      $region10: #{model_forward.1} parent=5 // pred_check_branch
        %141 = sbr.rel (%p138) target = $region12
      $region11: #{model_forward.1} parent=5 // pred_region
        %s142 = ssub.s32 %s13, 1
        // Predicated region
        $region13: #{model_forward.1} parent=11 // pred_check
          %p143 = pneg %p60
        $region14: #{model_forward.1} parent=11 // pred_check_branch
          %145 = sbr.rel (%p143) target = $region16
        $region15: #{model_forward.1} parent=11 // pred_region
          _
        $region16: #{model_forward.1} parent=11 // pred_fallthru
          _
        // Predicated region
        $region17: #{model_forward.1} parent=11 // pred_check
          %p146 = pneg %p81
        $region18: #{model_forward.1} parent=11 // pred_check_branch
          %148 = sbr.rel (%p146) target = $region20
        $region19: #{model_forward.1} parent=11 // pred_region
          _
        $region20: #{model_forward.1} parent=11 // pred_fallthru
          _
        // Predicated region
        $region21: #{model_forward.1} parent=11 // pred_check
          %p149 = pneg %p102
        $region22: #{model_forward.1} parent=11 // pred_check_branch
          %151 = sbr.rel (%p149) target = $region24
        $region23: #{model_forward.1} parent=11 // pred_region
          _
        $region24: #{model_forward.1} parent=11 // pred_fallthru
          _
      $region12: #{model_forward.1} parent=5 // pred_fallthru
        _
      %p152 = scmp.lt.s32.totalorder %s13, 2
      // Predicated region
      $region25: #{model_forward.1} parent=5 // pred_check
        %p153 = pneg %p152
      $region26: #{model_forward.1} parent=5 // pred_check_branch
        %155 = sbr.rel (%p153) target = $region28
      $region27: #{model_forward.1} parent=5 // pred_region
        // Predicated region
        $region29: #{model_forward.1} parent=27 // pred_check
          %p156 = pneg %p33
        $region30: #{model_forward.1} parent=27 // pred_check_branch
          %158 = sbr.rel (%p156) target = $region32
        $region31: #{model_forward.1} parent=27 // pred_region
          %s159 = smul.u32 8, %s13
          %p160 = scmp.lt.s32.totalorder %s159, 15
          %s161 = scalar_select %p160, %s159, 15
          %s162 = smul.addr %s161, 8
          %s163 = scalar_lea.vmem %s0, %s162
          %s164 = smul.u32 8, %s13
        $region32: #{model_forward.1} parent=27 // pred_fallthru
          _
      $region28: #{model_forward.1} parent=5 // pred_fallthru
        _
      %p165 = scmp.le.s32.totalorder 1, %s13
      %p166 = scmp.lt.s32.totalorder %s13, 3
      %p167 = pnand %p165, %p166
      %p168 = pneg %p167
      // Predicated region
      $region33: #{model_forward.1} parent=5 // pred_check
        _
      $region34: #{model_forward.1} parent=5 // pred_check_branch
        %170 = sbr.rel (%p167) target = $region36
      $region35: #{model_forward.1} parent=5 // pred_region
        %s171 = ssub.s32 %s13, 1
        %s172 = smul.u32 8, %s18
        %p173 = scmp.lt.s32.totalorder %s172, 15
        %s174 = scalar_select %p173, %s172, 15
        %s175 = smul.addr %s174, 8
        %s176 = scalar_lea.vmem %s0, %s175
        %p177 = pneg %p39
        %p178 = pneg %p36
        %p179 = pneg %p60
        %p180 = pneg %p57
        %p181 = pneg %p81
        %p182 = pneg %p78
        %p183 = pneg %p102
        %p184 = pneg %p99
        %p185 = pneg %p128
        %p186 = pneg %p125
        %s187 = sand.u32 %s115, 1
        %s188 = scalar_lea.sflag [#allocation3], %s187
        %s189 = sand.u32 %s115, 1
        %s190 = smul.addr %s189, 64
        %s191 = scalar_lea.vmem [#allocation2], %s190
        %s192 = smul.u32 8, %s18
        %p193 = scmp.lt.s32.totalorder %s192, 15
        %s194 = scalar_select %p193, %s192, 15
        %s195 = smul.addr %s194, 8
        %s196 = scalar_lea.vmem %s0, %s195
        %s197 = smul.u32 8, %s18
        %s198 = smul.u32 8, %s18
        %v199 = vld [vmem:[%s196] sm:$0xff]
        %v200 = vld [vmem:[%s196 + $0x8] sm:$0xff]
        %v201 = vld [vmem:[%s196 + $0x10] sm:$0xff]
        %v202 = vld [vmem:[%s196 + $0x18] sm:$0xff]
        %v203 = vld [vmem:[%s196 + $0x20] sm:$0xff]
        %v204 = vld [vmem:[%s196 + $0x28] sm:$0xff]
        %v205 = vld [vmem:[%s196 + $0x30] sm:$0xff]
        %v206 = vld [vmem:[%s196 + $0x38] sm:$0xff]
        %v207 = vsub.f32 %v199, 0.5
        %v208 = vsub.f32 %v200, 0.5
        %v209 = vsub.f32 %v201, 0.5
        %v210 = vsub.f32 %v202, 0.5
        %v211 = vsub.f32 %v203, 0.5
        %v212 = vsub.f32 %v204, 0.5
        %v213 = vsub.f32 %v205, 0.5
        %v214 = vsub.f32 %v206, 0.5
        %v215 = vld [vmem:[%s1] sm:$0xff]
        %v216 = vld [vmem:[%s1 + $0x8] sm:$0xff]
        %v217 = vld [vmem:[%s3] sm:$0x1]
        %vm218 = vcmask 130048
        %v220 = vsel %vm218, %v207, 0
        %v223 = vsel %vm218, %v208, 0
        %v226 = vsel %vm218, %v209, 0
        %v229 = vsel %vm218, %v210, 0
        %v232 = vsel %vm218, %v211, 0
        %v235 = vsel %vm218, %v212, 0
        %v238 = vsel %vm218, %v213, 0
        %v241 = vsel %vm218, %v214, 0
        %243 = vmatprep.subr.mxu0 0.0
        %244 = vmatpush1.msra.mxu0 0.0
        %245 = vmatprep.subr.mxu0 0.0
        %246 = vmatpush1.msra.mxu0 0.0
        %247 = vmatprep.subr.mxu0 0.0
        %248 = vmatpush1.msra.mxu0 0.0
        %249 = vmatprep.subr.mxu0 0.0
        %250 = vmatpush1.msra.mxu0 0.0
        %251 = vmatprep.subr.mxu0 0.0
        %252 = vmatpush1.msra.mxu0 0.0
        %253 = vmatprep.subr.mxu0 0.0
        %254 = vmatpush1.msra.mxu0 0.0
        %255 = vmatprep.subr.mxu0 0.0
        %256 = vmatpush1.msra.mxu0 0.0
        %257 = vmatprep.subr.mxu0 0.0
        %258 = vmatpush1.msra.mxu0 0.0
        %259 = vmatprep.subr.mxu0 0.0
        %260 = vmatpush1.msra.mxu0 0.0
        %261 = vmatprep.subr.mxu0 0.0
        %262 = vmatpush1.msra.mxu0 0.0
        %263 = vmatprep.subr.mxu0 0.0
        %264 = vmatpush1.msra.mxu0 0.0
        %265 = vmatprep.subr.mxu0 0.0
        %266 = vmatpush1.msra.mxu0 0.0
        %267 = vmatprep.subr.mxu0 0.0
        %268 = vmatpush1.msra.mxu0 0.0
        %269 = vmatprep.subr.mxu0 0.0
        %270 = vmatpush1.msra.mxu0 0.0
        %271 = vmatprep.subr.mxu0 0.0
        %272 = vmatpush1.msra.mxu0 %v216
        %273 = vmatprep.subr.mxu0 0.0
        %274 = vmatpush1.msra.mxu0 %v215
        %275 = vmatprep.subr.mxu0 0.0
        %276 = vmatpush2.msra.mxu0 0.0
        %277 = vmatprep.subr.mxu0 0.0
        %278 = vmatpush2.msra.mxu0 0.0
        %279 = vmatprep.subr.mxu0 0.0
        %280 = vmatpush2.msra.mxu0 0.0
        %281 = vmatprep.subr.mxu0 0.0
        %282 = vmatpush2.msra.mxu0 0.0
        %283 = vmatprep.subr.mxu0 0.0
        %284 = vmatpush2.msra.mxu0 0.0
        %285 = vmatprep.subr.mxu0 0.0
        %286 = vmatpush2.msra.mxu0 0.0
        %287 = vmatprep.subr.mxu0 0.0
        %288 = vmatpush2.msra.mxu0 0.0
        %289 = vmatprep.subr.mxu0 0.0
        %290 = vmatpush2.msra.mxu0 0.0
        %291 = vmatprep.subr.mxu0 0.0
        %292 = vmatpush2.msra.mxu0 0.0
        %293 = vmatprep.subr.mxu0 0.0
        %294 = vmatpush2.msra.mxu0 0.0
        %295 = vmatprep.subr.mxu0 0.0
        %296 = vmatpush2.msra.mxu0 0.0
        %297 = vmatprep.subr.mxu0 0.0
        %298 = vmatpush2.msra.mxu0 0.0
        %299 = vmatprep.subr.mxu0 0.0
        %300 = vmatpush2.msra.mxu0 0.0
        %301 = vmatprep.subr.mxu0 0.0
        %302 = vmatpush2.msra.mxu0 0.0
        %303 = vmatprep.subr.mxu0 0.0
        %304 = vmatpush2.msra.mxu0 0.0
        %305 = vmatprep.subr.mxu0 0.0
        %306 = vmatpush2.msra.mxu0 0.0
        %307 = vmatprep.mubr.f32.mxu0 0.0
        %308 = vmatmul.mubr.f32.gmra.mxu0 %v220
        %v309 = vpop.f32.mrf.mxu0
        %v310 = vadd.f32 0.0, %v309
        %v311 = vpop.f32.mrf.mxu0
        %312 = vmatprep.mubr.f32.mxu0 0.0
        %313 = vmatmul.mubr.f32.gmra.mxu0 %v223
        %v314 = vpop.f32.mrf.mxu0
        %v315 = vadd.f32 0.0, %v314
        %v316 = vpop.f32.mrf.mxu0
        %317 = vmatprep.mubr.f32.mxu0 0.0
        %318 = vmatmul.mubr.f32.gmra.mxu0 %v226
        %v319 = vpop.f32.mrf.mxu0
        %v320 = vadd.f32 0.0, %v319
        %v321 = vpop.f32.mrf.mxu0
        %322 = vmatprep.mubr.f32.mxu0 0.0
        %323 = vmatmul.mubr.f32.gmra.mxu0 %v229
        %v324 = vpop.f32.mrf.mxu0
        %v325 = vadd.f32 0.0, %v324
        %v326 = vpop.f32.mrf.mxu0
        %327 = vmatprep.mubr.f32.mxu0 0.0
        %328 = vmatmul.mubr.f32.gmra.mxu0 %v232
        %v329 = vpop.f32.mrf.mxu0
        %v330 = vadd.f32 0.0, %v329
        %v331 = vpop.f32.mrf.mxu0
        %332 = vmatprep.mubr.f32.mxu0 0.0
        %333 = vmatmul.mubr.f32.gmra.mxu0 %v235
        %v334 = vpop.f32.mrf.mxu0
        %v335 = vadd.f32 0.0, %v334
        %v336 = vpop.f32.mrf.mxu0
        %337 = vmatprep.mubr.f32.mxu0 0.0
        %338 = vmatmul.mubr.f32.gmra.mxu0 %v238
        %v339 = vpop.f32.mrf.mxu0
        %v340 = vadd.f32 0.0, %v339
        %v341 = vpop.f32.mrf.mxu0
        %342 = vmatprep.mubr.f32.mxu0 0.0
        %343 = vmatmul.mubr.f32.gmra.mxu0 %v241
        %v344 = vpop.f32.mrf.mxu0
        %v345 = vadd.f32 0.0, %v344
        %v346 = vpop.f32.mrf.mxu0
        %347 = vdwg.mxu0
        %v349 = vlaneseq
        %v350 = vshrl.u32 %v349, 7
        %v351 = vsub.s32 0, %v350
        %v352 = vrot.slane %v217, %v351
        %v354 = vadd.f32 %v310, %v352
        %v355 = vadd.f32 %v315, %v352
        %v356 = vadd.f32 %v320, %v352
        %v357 = vadd.f32 %v325, %v352
        %v358 = vadd.f32 %v330, %v352
        %v359 = vadd.f32 %v335, %v352
        %v360 = vadd.f32 %v340, %v352
        %v361 = vadd.f32 %v345, %v352
        %362 = vrot.lane.b32.xlu0 %v352, 16
        %v363 = vpop.permute.xlu0 %362
        %v365 = vadd.f32 %v310, %v363
        %v366 = vadd.f32 %v315, %v363
        %v367 = vadd.f32 %v320, %v363
        %v368 = vadd.f32 %v325, %v363
        %v369 = vadd.f32 %v330, %v363
        %v370 = vadd.f32 %v335, %v363
        %v371 = vadd.f32 %v340, %v363
        %v372 = vadd.f32 %v345, %v363
        %v373 = vmul.f32 %v354, 0.25
        %v374 = vmul.f32 %v355, 0.25
        %v375 = vmul.f32 %v356, 0.25
        %v376 = vmul.f32 %v357, 0.25
        %v377 = vmul.f32 %v358, 0.25
        %v378 = vmul.f32 %v359, 0.25
        %v379 = vmul.f32 %v360, 0.25
        %v380 = vmul.f32 %v361, 0.25
        %v381 = vsub.f32 %v373, 0.25
        %v382 = vsub.f32 %v374, 0.25
        %v383 = vsub.f32 %v375, 0.25
        %v384 = vsub.f32 %v376, 0.25
        %v385 = vsub.f32 %v377, 0.25
        %v386 = vsub.f32 %v378, 0.25
        %v387 = vsub.f32 %v379, 0.25
        %v388 = vsub.f32 %v380, 0.25
        %v389 = vmax.f32 %v365, 0.0
        %v390 = vmax.f32 %v366, 0.0
        %v391 = vmax.f32 %v367, 0.0
        %v392 = vmax.f32 %v368, 0.0
        %v393 = vmax.f32 %v369, 0.0
        %v394 = vmax.f32 %v370, 0.0
        %v395 = vmax.f32 %v371, 0.0
        %v396 = vmax.f32 %v372, 0.0
        %v397 = vmin.f32 %v389, 6.0
        %v398 = vmin.f32 %v390, 6.0
        %v399 = vmin.f32 %v391, 6.0
        %v400 = vmin.f32 %v392, 6.0
        %v401 = vmin.f32 %v393, 6.0
        %v402 = vmin.f32 %v394, 6.0
        %v403 = vmin.f32 %v395, 6.0
        %v404 = vmin.f32 %v396, 6.0
        %413 = vrot.lane.b32.xlu0 %v397, 112
        %v414 = vpop.permute.xlu0 %413
        %415 = vrot.lane.b32.xlu0 %v398, 112
        %v416 = vpop.permute.xlu0 %415
        %417 = vrot.lane.b32.xlu0 %v399, 112
        %v418 = vpop.permute.xlu0 %417
        %419 = vrot.lane.b32.xlu0 %v400, 112
        %v420 = vpop.permute.xlu0 %419
        %421 = vrot.lane.b32.xlu0 %v401, 112
        %v422 = vpop.permute.xlu0 %421
        %423 = vrot.lane.b32.xlu0 %v402, 112
        %v424 = vpop.permute.xlu0 %423
        %425 = vrot.lane.b32.xlu0 %v403, 112
        %v426 = vpop.permute.xlu0 %425
        %427 = vrot.lane.b32.xlu0 %v404, 112
        %v428 = vpop.permute.xlu0 %427
        %v437 = vsub.f32 %v381, %v414
        %v438 = vsub.f32 %v382, %v416
        %v439 = vsub.f32 %v383, %v418
        %v440 = vsub.f32 %v384, %v420
        %v441 = vsub.f32 %v385, %v422
        %v442 = vsub.f32 %v386, %v424
        %v443 = vsub.f32 %v387, %v426
        %v444 = vsub.f32 %v388, %v428
        %v445 = vadd.f32 %v437, 0.25
        %v446 = vadd.f32 %v438, 0.25
        %v447 = vadd.f32 %v439, 0.25
        %v448 = vadd.f32 %v440, 0.25
        %v449 = vadd.f32 %v441, 0.25
        %v450 = vadd.f32 %v442, 0.25
        %v451 = vadd.f32 %v443, 0.25
        %v452 = vadd.f32 %v444, 0.25
        %v453 = vmax.f32 %v445, 0.0
        %v454 = vmax.f32 %v446, 0.0
        %v455 = vmax.f32 %v447, 0.0
        %v456 = vmax.f32 %v448, 0.0
        %v457 = vmax.f32 %v449, 0.0
        %v458 = vmax.f32 %v450, 0.0
        %v459 = vmax.f32 %v451, 0.0
        %v460 = vmax.f32 %v452, 0.0
        %v461 = vmin.f32 %v453, 6.0
        %v462 = vmin.f32 %v454, 6.0
        %v463 = vmin.f32 %v455, 6.0
        %v464 = vmin.f32 %v456, 6.0
        %v465 = vmin.f32 %v457, 6.0
        %v466 = vmin.f32 %v458, 6.0
        %v467 = vmin.f32 %v459, 6.0
        %v468 = vmin.f32 %v460, 6.0
        %v469 = vld [vmem:[%s2] sm:$0xff]
        %v470 = vld [vmem:[%s2 + $0x8] sm:$0xff]
        %v471 = vld [vmem:[%s2 + $0x10] sm:$0xff]
        %v472 = vld [vmem:[%s2 + $0x18] sm:$0xff]
        %v473 = vld [vmem:[%s2 + $0x20] sm:$0xff]
        %v474 = vld [vmem:[%s2 + $0x28] sm:$0xff]
        %v475 = vld [vmem:[%s2 + $0x30] sm:$0xff]
        %v476 = vld [vmem:[%s2 + $0x38] sm:$0xff]
        %v477 = vmul.f32 %v461, %v469
        %v478 = vmul.f32 %v462, %v470
        %v479 = vmul.f32 %v463, %v471
        %v480 = vmul.f32 %v464, %v472
        %v481 = vmul.f32 %v465, %v473
        %v482 = vmul.f32 %v466, %v474
        %v483 = vmul.f32 %v467, %v475
        %v484 = vmul.f32 %v468, %v476
        %v485 = vmax.f32 %v477, 0.0
        %v486 = vmax.f32 %v478, 0.0
        %v487 = vmax.f32 %v479, 0.0
        %v488 = vmax.f32 %v480, 0.0
        %v489 = vmax.f32 %v481, 0.0
        %v490 = vmax.f32 %v482, 0.0
        %v491 = vmax.f32 %v483, 0.0
        %v492 = vmax.f32 %v484, 0.0
        %v493 = vmin.f32 %v485, 6.0
        %v494 = vmin.f32 %v486, 6.0
        %v495 = vmin.f32 %v487, 6.0
        %v496 = vmin.f32 %v488, 6.0
        %v497 = vmin.f32 %v489, 6.0
        %v498 = vmin.f32 %v490, 6.0
        %v499 = vmin.f32 %v491, 6.0
        %v500 = vmin.f32 %v492, 6.0
        %v501 = vadd.f32 %v493, 0.25
        %v502 = vadd.f32 %v494, 0.25
        %v503 = vadd.f32 %v495, 0.25
        %v504 = vadd.f32 %v496, 0.25
        %v505 = vadd.f32 %v497, 0.25
        %v506 = vadd.f32 %v498, 0.25
        %v507 = vadd.f32 %v499, 0.25
        %v508 = vadd.f32 %v500, 0.25
        %v509 = vmul.f32 %v501, %v381
        %v510 = vmul.f32 %v502, %v382
        %v511 = vmul.f32 %v503, %v383
        %v512 = vmul.f32 %v504, %v384
        %v513 = vmul.f32 %v505, %v385
        %v514 = vmul.f32 %v506, %v386
        %v515 = vmul.f32 %v507, %v387
        %v516 = vmul.f32 %v508, %v388
        %517 = vst.msk [vmem:[%s191] sm:$0xff] %vm218, %v509
        %518 = vst.msk [vmem:[%s191 + $0x8] sm:$0xff] %vm218, %v510
        %519 = vst.msk [vmem:[%s191 + $0x10] sm:$0xff] %vm218, %v511
        %520 = vst.msk [vmem:[%s191 + $0x18] sm:$0xff] %vm218, %v512
        %521 = vst.msk [vmem:[%s191 + $0x20] sm:$0xff] %vm218, %v513
        %522 = vst.msk [vmem:[%s191 + $0x28] sm:$0xff] %vm218, %v514
        %523 = vst.msk [vmem:[%s191 + $0x30] sm:$0xff] %vm218, %v515
        %524 = vst.msk [vmem:[%s191 + $0x38] sm:$0xff] %vm218, %v516
        %s525 = sand.u32 %s115, 1
        %s526 = scalar_lea.sflag [#allocation3], %s525
        %s527 = sand.u32 %s115, 1
        %s528 = smul.addr %s527, 64
        %s529 = scalar_lea.vmem [#allocation2], %s528
        // Predicated region
        $region37: #{model_forward.1} parent=35 // pred_check
          %p530 = pneg %p125
        $region38: #{model_forward.1} parent=35 // pred_check_branch
          %532 = sbr.rel (%p530) target = $region40
        $region39: #{model_forward.1} parent=35 // pred_region
          %s533 = smul.u32 8, %s18
          %s535 = ssub.s32 1024, 1024
          %536 = vsyncadd %s526, %s535
          %s537 = smul.addr %s533, 128
          %s538 = scalar_lea.hbm %s4, %s537
          %s539 = sshll.u32 %s529, 4
          %s540 = int_to_ptr.vmem [resolvable:$true] %s539
          %545 = dma.vmem_to_hbm [thread:$0]  %s540, 1024, %s538, %s526, 128, 128, 8
        $region40: #{model_forward.1} parent=35 // pred_fallthru
          _
      $region36: #{model_forward.1} parent=5 // pred_fallthru
        _
      %p546 = scmp.le.s32.totalorder 2, %s13
      // Predicated region
      $region41: #{model_forward.1} parent=5 // pred_check
        %p547 = pneg %p546
      $region42: #{model_forward.1} parent=5 // pred_check_branch
        %549 = sbr.rel (%p547) target = $region44
      $region43: #{model_forward.1} parent=5 // pred_region
        %s550 = ssub.s32 %s13, 2
        // Predicated region
        $region45: #{model_forward.1} parent=43 // pred_check
          %p551 = pneg %p131
        $region46: #{model_forward.1} parent=43 // pred_check_branch
          %553 = sbr.rel (%p551) target = $region48
        $region47: #{model_forward.1} parent=43 // pred_region
          %s554 = sand.u32 %s116, 1
          %s555 = scalar_lea.sflag [#allocation3], %s554
          %s556 = sand.u32 %s116, 1
          %s557 = smul.addr %s556, 64
          %s558 = scalar_lea.vmem [#allocation2], %s557
          %559 = dma.done %s555, 1024
        $region48: #{model_forward.1} parent=43 // pred_fallthru
          _
      $region44: #{model_forward.1} parent=5 // pred_fallthru
        _
    $region6: #{model_forward.1} parent=1 // loop_footer
      %s17 = sadd.s32 1, %s13
    $region7: #{model_forward.1} parent=1 // loop_footer_branch
      %12 = sbr.rel target = $region3
    $region8: #{model_forward.1} parent=1 // loop_exit
      _
    %560 = vsyncpa [#allocation3], 1
    %s561 = scalar_lea.sflag [#allocation3], 1
    %562 = vsyncpa %s561, 1

</llo_original>
